<compile_context>
chip_gen: v6e
topology: v6e:2x2x1
jax: 0.10.0
libtpu: 0.0.40
codegen_flags: <defaults>
</compile_context>

<pallas_src>
import functools

import jax
import jax.numpy as jnp
from jax import lax
from jax.experimental import pallas as pl
from jax.experimental.pallas import tpu as pltpu

HIDDEN = 50
HIDDEN_PAD = 128   # pad hidden 50 -> 128 lanes (zero columns/rows); one MXU pass
OUT_DIM = 2        # [mean, pre-softplus variance]
LANE = 128


def _round_up(n, m):
    return ((n + m - 1) // m) * m


@functools.lru_cache(maxsize=1)
def _vmem_limit_bytes():
    """Per-generation scoped-VMEM limit with headroom for compiler-internal scratch."""
    try:
        cap = int(pltpu.get_tpu_info().vmem_capacity_bytes)
    except Exception:
        cap = 64 << 20          # conservative fallback: v7x per-TC VMEM
    # leave ~16 MiB headroom; never request more than ~100 MiB (v5e/v6e: 128 MiB phys)
    return int(min(max(cap - (16 << 20), 32 << 20), 100 << 20))


def _choose_block_b(F, itemsize, vmem_limit_bytes):
    """Largest batch tile (multiple of 128) whose total live VMEM fits the limit.

    Accounts for: lane-padded x (double-buffered), the (TB, 128) f32 hidden
    intermediate (+ pre-ReLU temp), the sublane-padded (2, TB) output block
    (double-buffered), and the resident (double-buffered) weights/biases."""
    f_pad = _round_up(max(F, 1), LANE)
    fixed = 2 * (f_pad * HIDDEN_PAD * itemsize      # W1  (x2 buffers)
                 + 8 * HIDDEN_PAD * 4               # b1  padded to 8 sublanes
                 + 8 * HIDDEN_PAD * 4               # W2^T (2,128) padded to 8 sublanes
                 + 8 * LANE * 4)                    # b2^T (2,1) padded tile
    headroom = 4 << 20
    budget = max(vmem_limit_bytes - fixed - headroom, 1 << 20)
    per_row = (2 * f_pad * itemsize     # x tile, lane-padded, double-buffered
               + 2 * HIDDEN_PAD * 4     # h + pre-ReLU temporary (f32)
               + 2 * 8 * 4)             # (2, TB) output, sublane-padded, x2 buffers
    tb = budget // per_row
    return int(max(LANE, (tb // LANE) * LANE))
    # TODO(synk): for F in the thousands, pl.Buffered(1) on the weight specs (and
    # bf16 W1) would halve resident-weight VMEM and allow larger TB on v7x.


def normal_model_kernel(x_ref, w1_ref, b1_ref, w2t_ref, b2t_ref, out_ref):
    # TODO(synk): dropout is identity (eval/inference mode); training-mode dropout
    # would need pltpu.prng_seed/prng_random_bits masking + 1/(1-p) scaling.
    x = x_ref[...]                                           # (TB, F), f32 or bf16
    # Layer 1: Linear(F, 128-padded hidden) on the MXU, f32 accumulation.
    h = jnp.dot(x, w1_ref[...], preferred_element_type=jnp.float32)
    h = jnp.maximum(h + b1_ref[...], 0.0)                    # bias + ReLU in f32 (VPU)
    # Layer 2 computed transposed -> lane-dense (2, TB) output block:
    #   out_t[o, b] = sum_k W2^T[o, k] * h[b, k]  ==  (h @ W2)[b, o]
    out_t = lax.dot_general(
        w2t_ref[...], h,
        dimension_numbers=(((1,), (1,)), ((), ())),
        preferred_element_type=jnp.float32,
    ) + b2t_ref[...]                                         # (2,1) broadcast over lanes
    # Row 0 -> mean (raw); row 1 -> softplus(.) + 1e-6 (variance).
    # Stable softplus = max(x,0) + log1p(exp(-|x|)); sublane-index select keeps this
    # a pure VPU/EUP op on a dense (2, TB) slab.
    sp = jnp.maximum(out_t, 0.0) + jnp.log1p(jnp.exp(-jnp.abs(out_t)))
    row = lax.broadcasted_iota(jnp.int32, out_t.shape, dimension=0)
    out_ref[...] = jnp.where(row == 1, sp + 1e-6, out_t)


def normal_model_forward(x, w1p, b1p, w2t, b2t, *, block_b=None):
    """x: (B, n_features). Padded params from pad_params(). Returns (mean (B,), var (B,))."""
    B, F = x.shape
    if x.dtype != w1p.dtype:
        x = x.astype(w1p.dtype)     # bf16 x halves HBM traffic when W1 is bf16
    limit = _vmem_limit_bytes()
    bp_min = _round_up(B, LANE)

    if block_b is None:
        tb = _choose_block_b(F, x.dtype.itemsize, limit)
        # keep >= 2 batch tiles (when B allows) so ("parallel",) uses both v7x TCs
        if bp_min >= 2 * LANE:
            tb = min(tb, _round_up(bp_min // 2, LANE))
    else:
        tb = _round_up(max(int(block_b), LANE), LANE)
    tb = min(tb, bp_min)

    Bp = _round_up(B, tb)
    if Bp != B:
        x = jnp.pad(x, ((0, Bp - B), (0, 0)))
    grid = (Bp // tb,)

    hp = w1p.shape[1]
    cost = pl.CostEstimate(
        flops=2 * Bp * F * hp + 2 * Bp * hp * OUT_DIM,
        transcendentals=2 * Bp * OUT_DIM,  # exp + log1p of the softplus
        bytes_accessed=int(
            Bp * F * x.dtype.itemsize
            + w1p.size * w1p.dtype.itemsize
            + b1p.size * 4 + w2t.size * 4 + b2t.size * 4
            + OUT_DIM * Bp * 4
        ),
    )

    out = pl.pallas_call(
        normal_model_kernel,
        out_shape=jax.ShapeDtypeStruct((OUT_DIM, Bp), jnp.float32),
        grid_spec=pltpu.PrefetchScalarGridSpec(
            num_scalar_prefetch=0,
            grid=grid,
            in_specs=[
                pl.BlockSpec((tb, F), lambda i: (i, 0)),         # x: streamed per tile
                pl.BlockSpec((F, hp), lambda i: (0, 0)),         # W1: resident
                pl.BlockSpec((1, hp), lambda i: (0, 0)),         # b1: resident
                pl.BlockSpec((OUT_DIM, hp), lambda i: (0, 0)),   # W2^T: resident
                pl.BlockSpec((OUT_DIM, 1), lambda i: (0, 0)),    # b2^T: resident
            ],
            out_specs=pl.BlockSpec((OUT_DIM, tb), lambda i: (0, i)),  # lane-dense (2, TB)
        ),
        compiler_params=pltpu.CompilerParams(
            dimension_semantics=("parallel",),   # independent batch tiles (megacore)
            vmem_limit_bytes=limit,
        ),
        cost_estimate=cost,
    )(x, w1p, b1p, w2t, b2t)

    # Trivial row split done in the wrapper (kept out of the kernel).
    return out[0, :B], out[1, :B]


def init_params(key, n_features, hidden=HIDDEN, out=OUT_DIM):
    """nn.Linear-style U(-1/sqrt(fan_in), 1/sqrt(fan_in)) init, torch-equivalent layout."""
    k1, k2, k3, k4 = jax.random.split(key, 4)
    bound1 = 1.0 / (n_features ** 0.5)
    bound2 = 1.0 / (hidden ** 0.5)
    w1 = jax.random.uniform(k1, (n_features, hidden), jnp.float32, -bound1, bound1)
    b1 = jax.random.uniform(k2, (hidden,), jnp.float32, -bound1, bound1)
    w2 = jax.random.uniform(k3, (hidden, out), jnp.float32, -bound2, bound2)
    b2 = jax.random.uniform(k4, (out,), jnp.float32, -bound2, bound2)
    return w1, b1, w2, b2


def pad_params(w1, b1, w2, b2, hidden_pad=HIDDEN_PAD, matmul_dtype=jnp.float32):
    """One-time layout prep: pad hidden 50 -> 128 with zeros; keep layer-2 weights
    transposed (2, 128) so the kernel emits a lane-dense (2, TB) block.
    W2/b1/b2 stay f32 even in the bf16 path (f32 accumulate / f32 epilogue)."""
    F, H = w1.shape
    w1p = jnp.zeros((F, hidden_pad), matmul_dtype).at[:, :H].set(w1.astype(matmul_dtype))
    b1p = jnp.zeros((1, hidden_pad), jnp.float32).at[:, :H].set(b1.reshape(1, H))
    w2t = jnp.zeros((w2.shape[1], hidden_pad), jnp.float32).at[:, :H].set(w2.T)
    b2t = b2.reshape(-1, 1).astype(jnp.float32)
    return w1p, b1p, w2t, b2t


def reference_forward(x, w1, b1, w2, b2):
    h = jnp.maximum(x @ w1 + b1, 0.0)
    out = h @ w2 + b2
    return out[:, 0], jax.nn.softplus(out[:, 1]) + 1e-6


if __name__ == "__main__":
    key = jax.random.PRNGKey(0)
    k_x, k_p, k_x2 = jax.random.split(key, 3)

    n_features = 32
    w1, b1, w2, b2 = init_params(k_p, n_features)
    w1p, b1p, w2t, b2t = pad_params(w1, b1, w2, b2)

    fwd = jax.jit(normal_model_forward, static_argnames=("block_b",))

    # --- small single-tile f32 check --------------------------------------
    x = jax.random.normal(k_x, (8, n_features), dtype=jnp.float32)
    mean, var = fwd(x, w1p, b1p, w2t, b2t)
    jax.block_until_ready((mean, var))
    mean_ref, var_ref = reference_forward(x, w1, b1, w2, b2)
    assert mean.shape == (8,) and var.shape == (8,)
    assert jnp.allclose(mean, mean_ref, atol=1e-4, rtol=1e-4)
    assert jnp.allclose(var, var_ref, atol=1e-4, rtol=1e-4)
    assert bool(jnp.all(var > 0))

    # --- multi-tile f32: automatic tiling (>=2 tiles for megacore) --------
    x2 = jax.random.normal(k_x2, (300, n_features), dtype=jnp.float32)
    mean2, var2 = fwd(x2, w1p, b1p, w2t, b2t)
    jax.block_until_ready((mean2, var2))
    mean2_ref, var2_ref = reference_forward(x2, w1, b1, w2, b2)
    assert mean2.shape == (300,) and var2.shape == (300,)
    assert jnp.allclose(mean2, mean2_ref, atol=1e-4, rtol=1e-4)
    assert jnp.allclose(var2, var2_ref, atol=1e-4, rtol=1e-4)
    assert bool(jnp.all(var2 > 0))

    # --- multi-tile f32: forced small tiles (exercises grid of 3 + padding) ---
    mean3, var3 = fwd(x2, w1p, b1p, w2t, b2t, block_b=128)
    jax.block_until_ready((mean3, var3))
    assert jnp.allclose(mean3, mean2_ref, atol=1e-4, rtol=1e-4)
    assert jnp.allclose(var3, var2_ref, atol=1e-4, rtol=1e-4)

    # --- bf16 matmul-input path (halves x HBM traffic on v6e/v7x) ---------
    w1p_bf, b1p_bf, w2t_bf, b2t_bf = pad_params(w1, b1, w2, b2, matmul_dtype=jnp.bfloat16)
    mean_bf, var_bf = fwd(x2, w1p_bf, b1p_bf, w2t_bf, b2t_bf)   # x auto-cast to bf16
    jax.block_until_ready((mean_bf, var_bf))
    assert jnp.allclose(mean_bf.astype(jnp.float32), mean2_ref, atol=5e-2, rtol=5e-2)
    assert jnp.allclose(var_bf.astype(jnp.float32), var2_ref, atol=5e-2, rtol=5e-2)
    assert bool(jnp.all(var_bf > 0))

    print("KERNEL_OK")
</pallas_src>

<mosaic_0001>
module attributes {stable_mosaic.version = 11 : i64} {
  func.func @normal_model_kernel(%arg0: i32, %arg1: memref<128x32xf32, #tpu.memory_space<vmem>>, %arg2: memref<32x128xf32, #tpu.memory_space<vmem>>, %arg3: memref<1x128xf32, #tpu.memory_space<vmem>>, %arg4: memref<2x128xf32, #tpu.memory_space<vmem>>, %arg5: memref<2x1xf32, #tpu.memory_space<vmem>>, %arg6: memref<2x128xf32, #tpu.memory_space<vmem>>) attributes {dimension_semantics = [#tpu.dimension_semantics<parallel>], iteration_bounds = array<i64: 1>, scalar_prefetch = 0 : i64, scratch_operands = 0 : i64, tpu.core_type = #tpu.core_type<tc>, window_params = [{transform_indices = @transform_0, window_bounds = array<i64: 128, 32>}, {pipeline_mode = #tpu.pipeline_mode<synchronous>, transform_indices = @transform_1, window_bounds = array<i64: 32, 128>}, {pipeline_mode = #tpu.pipeline_mode<synchronous>, transform_indices = @transform_2, window_bounds = array<i64: 1, 128>}, {pipeline_mode = #tpu.pipeline_mode<synchronous>, transform_indices = @transform_3, window_bounds = array<i64: 2, 128>}, {pipeline_mode = #tpu.pipeline_mode<synchronous>, transform_indices = @transform_4, window_bounds = array<i64: 2, 1>}, {transform_indices = @transform_5, window_bounds = array<i64: 2, 128>}]} {
    %c0 = arith.constant 0 : index
    %c0_0 = arith.constant 0 : index
    %0 = vector.load %arg1[%c0, %c0_0] : memref<128x32xf32, #tpu.memory_space<vmem>>, vector<128x32xf32>
    %c0_1 = arith.constant 0 : index
    %c0_2 = arith.constant 0 : index
    %1 = vector.load %arg2[%c0_1, %c0_2] : memref<32x128xf32, #tpu.memory_space<vmem>>, vector<32x128xf32>
    %cst = arith.constant dense<0.000000e+00> : vector<128x128xf32>
    %2 = tpu.matmul %0, %1, %cst {dimension_numbers = #tpu.dot_dimension_numbers<[1], [0], [0], [1], [0, 0, 1, 1], [], []>} : vector<128x32xf32>, vector<32x128xf32>, vector<128x128xf32> -> vector<128x128xf32>
    %c0_3 = arith.constant 0 : index
    %c0_4 = arith.constant 0 : index
    %3 = vector.load %arg3[%c0_3, %c0_4] : memref<1x128xf32, #tpu.memory_space<vmem>>, vector<1x128xf32>
    %4 = vector.broadcast %3 : vector<1x128xf32> to vector<128x128xf32>
    %5 = arith.addf %2, %4 : vector<128x128xf32>
    %cst_5 = arith.constant 0.000000e+00 : f32
    %6 = vector.broadcast %cst_5 : f32 to vector<128x128xf32>
    %7 = arith.maximumf %5, %6 : vector<128x128xf32>
    %c0_6 = arith.constant 0 : index
    %c0_7 = arith.constant 0 : index
    %8 = vector.load %arg4[%c0_6, %c0_7] : memref<2x128xf32, #tpu.memory_space<vmem>>, vector<2x128xf32>
    %cst_8 = arith.constant dense<0.000000e+00> : vector<2x128xf32>
    %9 = tpu.matmul %8, %7, %cst_8 {dimension_numbers = #tpu.dot_dimension_numbers<[1], [1], [0], [0], [0, 0, 1, 0], [], []>} : vector<2x128xf32>, vector<128x128xf32>, vector<2x128xf32> -> vector<2x128xf32>
    %c0_9 = arith.constant 0 : index
    %c0_10 = arith.constant 0 : index
    %10 = vector.load %arg5[%c0_9, %c0_10] : memref<2x1xf32, #tpu.memory_space<vmem>>, vector<2x1xf32>
    %11 = vector.broadcast %10 : vector<2x1xf32> to vector<2x128xf32>
    %12 = arith.addf %9, %11 : vector<2x128xf32>
    %cst_11 = arith.constant 0.000000e+00 : f32
    %13 = vector.broadcast %cst_11 : f32 to vector<2x128xf32>
    %14 = arith.maximumf %12, %13 : vector<2x128xf32>
    %15 = math.absf %12 : vector<2x128xf32>
    %cst_12 = arith.constant 0.000000e+00 : f32
    %16 = vector.broadcast %cst_12 : f32 to vector<2x128xf32>
    %17 = arith.subf %16, %15 : vector<2x128xf32>
    %18 = math.exp %17 : vector<2x128xf32>
    %19 = math.log1p %18 : vector<2x128xf32>
    %20 = arith.addf %14, %19 : vector<2x128xf32>
    %21 = tpu.iota {dimensions = array<i32: 0>} : vector<2x128xi32>
    %c1_i32 = arith.constant 1 : i32
    %22 = vector.broadcast %c1_i32 : i32 to vector<2x128xi32>
    %23 = arith.cmpi eq, %21, %22 : vector<2x128xi32>
    %cst_13 = arith.constant 9.99999997E-7 : f32
    %24 = vector.broadcast %cst_13 : f32 to vector<2x128xf32>
    %25 = arith.addf %20, %24 : vector<2x128xf32>
    %26 = arith.select %23, %25, %12 : vector<2x128xi1>, vector<2x128xf32>
    %c0_14 = arith.constant 0 : index
    %c0_15 = arith.constant 0 : index
    %27 = vector.load %arg6[%c0_14, %c0_15] : memref<2x128xf32, #tpu.memory_space<vmem>>, vector<2x128xf32>
    tpu.vector_store %arg6[%c0_14, %c0_15], %26 {strides = array<i32>} : memref<2x128xf32, #tpu.memory_space<vmem>>, vector<2x128xf32>,
    return
  }
  func.func @transform_0(%arg0: i32) -> (i32, i32) {
    %c0_i32 = arith.constant 0 : i32
    %c0_i32_0 = arith.constant 0 : i32
    return %arg0, %c0_i32 : i32, i32
  }
  func.func @transform_1(%arg0: i32) -> (i32, i32) {
    %c0_i32 = arith.constant 0 : i32
    %c0_i32_0 = arith.constant 0 : i32
    %c0_i32_1 = arith.constant 0 : i32
    return %c0_i32, %c0_i32_0 : i32, i32
  }
  func.func @transform_2(%arg0: i32) -> (i32, i32) {
    %c0_i32 = arith.constant 0 : i32
    %c0_i32_0 = arith.constant 0 : i32
    %c0_i32_1 = arith.constant 0 : i32
    return %c0_i32, %c0_i32_0 : i32, i32
  }
  func.func @transform_3(%arg0: i32) -> (i32, i32) {
    %c0_i32 = arith.constant 0 : i32
    %c0_i32_0 = arith.constant 0 : i32
    %c0_i32_1 = arith.constant 0 : i32
    return %c0_i32, %c0_i32_0 : i32, i32
  }
  func.func @transform_4(%arg0: i32) -> (i32, i32) {
    %c0_i32 = arith.constant 0 : i32
    %c0_i32_0 = arith.constant 0 : i32
    %c0_i32_1 = arith.constant 0 : i32
    return %c0_i32, %c0_i32_0 : i32, i32
  }
  func.func @transform_5(%arg0: i32) -> (i32, i32) {
    %c0_i32 = arith.constant 0 : i32
    %c0_i32_0 = arith.constant 0 : i32
    return %c0_i32, %arg0 : i32, i32
  }
}

</mosaic_0001>

<llo_original>
// kernel: normal_model_forward.1
$region0: #{normal_model_forward.1}
  #allocation0 [shape = 'u32[]', space=smem, size = 0x4, offset = 0x4, fixed_abs, tag = 'smem constant byte address 0x4 - core index']
  #allocation1 [shape = 'u32[144,128]{1,0:T(1,128)}', space=vmem, size = 0x12000, scoped, tag = 'internal scratch']
  %s0 = inlined_call_operand.vmem [shape: f32[128,32], index: 0, kind: input, shape index: {}]
  %s1 = inlined_call_operand.vmem [shape: f32[32,128], index: 1, kind: input, shape index: {}]
  %s2 = inlined_call_operand.vmem [shape: f32[1,128], index: 2, kind: input, shape index: {}]
  %s3 = inlined_call_operand.vmem [shape: f32[2,128], index: 3, kind: input, shape index: {}]
  %s4 = inlined_call_operand.vmem [shape: f32[2,1], index: 4, kind: input, shape index: {}]
  %s5 = inlined_call_operand.vmem [shape: f32[2,128], index: 5, kind: output, shape index: {}]
  %s6 = sld [smem:[#allocation0]]
  $region30: #{normal_model_forward.1} parent=0
    _
  %s8 = ssub.s32 1, %s6
  %s9 = scalar_select 0, %s8, %s6
  // Predicated region
  $region2: #{normal_model_forward.1} parent=0 // pred_check
    _
  $region3: #{normal_model_forward.1} parent=0 // pred_check_branch
    %11 = sbr.rel (0) target = $region5
  $region4: #{normal_model_forward.1} parent=0 // pred_region
    _
  $region5: #{normal_model_forward.1} parent=0 // pred_fallthru
    _
  // Predicated region
  $region6: #{normal_model_forward.1} parent=0 // pred_check
    _
  $region7: #{normal_model_forward.1} parent=0 // pred_check_branch
    %13 = sbr.rel (0) target = $region9
  $region8: #{normal_model_forward.1} parent=0 // pred_region
    _
  $region9: #{normal_model_forward.1} parent=0 // pred_fallthru
    _
  // Predicated region
  $region10: #{normal_model_forward.1} parent=0 // pred_check
    _
  $region11: #{normal_model_forward.1} parent=0 // pred_check_branch
    %15 = sbr.rel (0) target = $region13
  $region12: #{normal_model_forward.1} parent=0 // pred_region
    _
  $region13: #{normal_model_forward.1} parent=0 // pred_fallthru
    _
  // Predicated region
  $region14: #{normal_model_forward.1} parent=0 // pred_check
    _
  $region15: #{normal_model_forward.1} parent=0 // pred_check_branch
    %17 = sbr.rel (0) target = $region17
  $region16: #{normal_model_forward.1} parent=0 // pred_region
    _
  $region17: #{normal_model_forward.1} parent=0 // pred_fallthru
    _
  // Predicated region
  $region18: #{normal_model_forward.1} parent=0 // pred_check
    _
  $region19: #{normal_model_forward.1} parent=0 // pred_check_branch
    %19 = sbr.rel (0) target = $region21
  $region20: #{normal_model_forward.1} parent=0 // pred_region
    _
  $region21: #{normal_model_forward.1} parent=0 // pred_fallthru
    _
  %v20 = vld [vmem:[%s0] sm:$0xff]
  %v21 = vld [vmem:[%s0 + $0x8] sm:$0xff]
  %v22 = vld [vmem:[%s0 + $0x10] sm:$0xff]
  %v23 = vld [vmem:[%s0 + $0x18] sm:$0xff]
  %v24 = vld [vmem:[%s0 + $0x20] sm:$0xff]
  %v25 = vld [vmem:[%s0 + $0x28] sm:$0xff]
  %v26 = vld [vmem:[%s0 + $0x30] sm:$0xff]
  %v27 = vld [vmem:[%s0 + $0x38] sm:$0xff]
  %v28 = vld [vmem:[%s0 + $0x40] sm:$0xff]
  %v29 = vld [vmem:[%s0 + $0x48] sm:$0xff]
  %v30 = vld [vmem:[%s0 + $0x50] sm:$0xff]
  %v31 = vld [vmem:[%s0 + $0x58] sm:$0xff]
  %v32 = vld [vmem:[%s0 + $0x60] sm:$0xff]
  %v33 = vld [vmem:[%s0 + $0x68] sm:$0xff]
  %v34 = vld [vmem:[%s0 + $0x70] sm:$0xff]
  %v35 = vld [vmem:[%s0 + $0x78] sm:$0xff]
  %v36 = vld [vmem:[%s1] sm:$0xff]
  %v37 = vld [vmem:[%s1 + $0x8] sm:$0xff]
  %v38 = vld [vmem:[%s1 + $0x10] sm:$0xff]
  %v39 = vld [vmem:[%s1 + $0x18] sm:$0xff]
  %v40 = vld [vmem:[%s2] sm:$0x1]
  %v42 = vlaneseq
  %v43 = vshrl.u32 %v42, 7
  %v44 = vsub.s32 0, %v43
  %v45 = vrot.slane %v40, %v44
  %vm47 = vcmask 261120
  %v49 = vsel %vm47, %v20, 0
  %v52 = vsel %vm47, %v21, 0
  %v55 = vsel %vm47, %v22, 0
  %v58 = vsel %vm47, %v23, 0
  %v61 = vsel %vm47, %v24, 0
  %v64 = vsel %vm47, %v25, 0
  %v67 = vsel %vm47, %v26, 0
  %v70 = vsel %vm47, %v27, 0
  %v73 = vsel %vm47, %v28, 0
  %v76 = vsel %vm47, %v29, 0
  %v79 = vsel %vm47, %v30, 0
  %v82 = vsel %vm47, %v31, 0
  %v85 = vsel %vm47, %v32, 0
  %v88 = vsel %vm47, %v33, 0
  %v91 = vsel %vm47, %v34, 0
  %v94 = vsel %vm47, %v35, 0
  %96 = vmatprep.subr.mxu0 0.0
  %97 = vmatpush1.msra.mxu0 0.0
  %98 = vmatprep.subr.mxu0 0.0
  %99 = vmatpush1.msra.mxu0 0.0
  %100 = vmatprep.subr.mxu0 0.0
  %101 = vmatpush1.msra.mxu0 0.0
  %102 = vmatprep.subr.mxu0 0.0
  %103 = vmatpush1.msra.mxu0 0.0
  %104 = vmatprep.subr.mxu0 0.0
  %105 = vmatpush1.msra.mxu0 0.0
  %106 = vmatprep.subr.mxu0 0.0
  %107 = vmatpush1.msra.mxu0 0.0
  %108 = vmatprep.subr.mxu0 0.0
  %109 = vmatpush1.msra.mxu0 0.0
  %110 = vmatprep.subr.mxu0 0.0
  %111 = vmatpush1.msra.mxu0 0.0
  %112 = vmatprep.subr.mxu0 0.0
  %113 = vmatpush1.msra.mxu0 0.0
  %114 = vmatprep.subr.mxu0 0.0
  %115 = vmatpush1.msra.mxu0 0.0
  %116 = vmatprep.subr.mxu0 0.0
  %117 = vmatpush1.msra.mxu0 0.0
  %118 = vmatprep.subr.mxu0 0.0
  %119 = vmatpush1.msra.mxu0 0.0
  %120 = vmatprep.subr.mxu0 0.0
  %121 = vmatpush1.msra.mxu0 %v39
  %122 = vmatprep.subr.mxu0 0.0
  %123 = vmatpush1.msra.mxu0 %v38
  %124 = vmatprep.subr.mxu0 0.0
  %125 = vmatpush1.msra.mxu0 %v37
  %126 = vmatprep.subr.mxu0 0.0
  %127 = vmatpush1.msra.mxu0 %v36
  %128 = vmatprep.subr.mxu0 0.0
  %129 = vmatpush2.msra.mxu0 0.0
  %130 = vmatprep.subr.mxu0 0.0
  %131 = vmatpush2.msra.mxu0 0.0
  %132 = vmatprep.subr.mxu0 0.0
  %133 = vmatpush2.msra.mxu0 0.0
  %134 = vmatprep.subr.mxu0 0.0
  %135 = vmatpush2.msra.mxu0 0.0
  %136 = vmatprep.subr.mxu0 0.0
  %137 = vmatpush2.msra.mxu0 0.0
  %138 = vmatprep.subr.mxu0 0.0
  %139 = vmatpush2.msra.mxu0 0.0
  %140 = vmatprep.subr.mxu0 0.0
  %141 = vmatpush2.msra.mxu0 0.0
  %142 = vmatprep.subr.mxu0 0.0
  %143 = vmatpush2.msra.mxu0 0.0
  %144 = vmatprep.subr.mxu0 0.0
  %145 = vmatpush2.msra.mxu0 0.0
  %146 = vmatprep.subr.mxu0 0.0
  %147 = vmatpush2.msra.mxu0 0.0
  %148 = vmatprep.subr.mxu0 0.0
  %149 = vmatpush2.msra.mxu0 0.0
  %150 = vmatprep.subr.mxu0 0.0
  %151 = vmatpush2.msra.mxu0 0.0
  %152 = vmatprep.subr.mxu0 0.0
  %153 = vmatpush2.msra.mxu0 0.0
  %154 = vmatprep.subr.mxu0 0.0
  %155 = vmatpush2.msra.mxu0 0.0
  %156 = vmatprep.subr.mxu0 0.0
  %157 = vmatpush2.msra.mxu0 0.0
  %158 = vmatprep.subr.mxu0 0.0
  %159 = vmatpush2.msra.mxu0 0.0
  %160 = vmatprep.mubr.f32.mxu0 0.0
  %161 = vmatmul.mubr.f32.gmra.mxu0 %v49
  %v162 = vpop.f32.mrf.mxu0
  %v163 = vadd.f32 %v45, %v162
  %v164 = vpop.f32.mrf.mxu0
  %165 = vmatprep.mubr.f32.mxu0 0.0
  %166 = vmatmul.mubr.f32.gmra.mxu0 %v52
  %v167 = vpop.f32.mrf.mxu0
  %v168 = vadd.f32 %v45, %v167
  %v169 = vpop.f32.mrf.mxu0
  %170 = vmatprep.mubr.f32.mxu0 0.0
  %171 = vmatmul.mubr.f32.gmra.mxu0 %v55
  %v172 = vpop.f32.mrf.mxu0
  %v173 = vadd.f32 %v45, %v172
  %v174 = vpop.f32.mrf.mxu0
  %175 = vmatprep.mubr.f32.mxu0 0.0
  %176 = vmatmul.mubr.f32.gmra.mxu0 %v58
  %v177 = vpop.f32.mrf.mxu0
  %v178 = vadd.f32 %v45, %v177
  %v179 = vpop.f32.mrf.mxu0
  %180 = vmatprep.mubr.f32.mxu0 0.0
  %181 = vmatmul.mubr.f32.gmra.mxu0 %v61
  %v182 = vpop.f32.mrf.mxu0
  %v183 = vadd.f32 %v45, %v182
  %v184 = vpop.f32.mrf.mxu0
  %185 = vmatprep.mubr.f32.mxu0 0.0
  %186 = vmatmul.mubr.f32.gmra.mxu0 %v64
  %v187 = vpop.f32.mrf.mxu0
  %v188 = vadd.f32 %v45, %v187
  %v189 = vpop.f32.mrf.mxu0
  %190 = vmatprep.mubr.f32.mxu0 0.0
  %191 = vmatmul.mubr.f32.gmra.mxu0 %v67
  %v192 = vpop.f32.mrf.mxu0
  %v193 = vadd.f32 %v45, %v192
  %v194 = vpop.f32.mrf.mxu0
  %195 = vmatprep.mubr.f32.mxu0 0.0
  %196 = vmatmul.mubr.f32.gmra.mxu0 %v70
  %v197 = vpop.f32.mrf.mxu0
  %v198 = vadd.f32 %v45, %v197
  %v199 = vpop.f32.mrf.mxu0
  %200 = vmatprep.mubr.f32.mxu0 0.0
  %201 = vmatmul.mubr.f32.gmra.mxu0 %v73
  %v202 = vpop.f32.mrf.mxu0
  %v203 = vadd.f32 %v45, %v202
  %v204 = vpop.f32.mrf.mxu0
  %205 = vmatprep.mubr.f32.mxu0 0.0
  %206 = vmatmul.mubr.f32.gmra.mxu0 %v76
  %v207 = vpop.f32.mrf.mxu0
  %v208 = vadd.f32 %v45, %v207
  %v209 = vpop.f32.mrf.mxu0
  %210 = vmatprep.mubr.f32.mxu0 0.0
  %211 = vmatmul.mubr.f32.gmra.mxu0 %v79
  %v212 = vpop.f32.mrf.mxu0
  %v213 = vadd.f32 %v45, %v212
  %v214 = vpop.f32.mrf.mxu0
  %215 = vmatprep.mubr.f32.mxu0 0.0
  %216 = vmatmul.mubr.f32.gmra.mxu0 %v82
  %v217 = vpop.f32.mrf.mxu0
  %v218 = vadd.f32 %v45, %v217
  %v219 = vpop.f32.mrf.mxu0
  %220 = vmatprep.mubr.f32.mxu0 0.0
  %221 = vmatmul.mubr.f32.gmra.mxu0 %v85
  %v222 = vpop.f32.mrf.mxu0
  %v223 = vadd.f32 %v45, %v222
  %v224 = vpop.f32.mrf.mxu0
  %225 = vmatprep.mubr.f32.mxu0 0.0
  %226 = vmatmul.mubr.f32.gmra.mxu0 %v88
  %v227 = vpop.f32.mrf.mxu0
  %v228 = vadd.f32 %v45, %v227
  %v229 = vpop.f32.mrf.mxu0
  %230 = vmatprep.mubr.f32.mxu0 0.0
  %231 = vmatmul.mubr.f32.gmra.mxu0 %v91
  %v232 = vpop.f32.mrf.mxu0
  %v233 = vadd.f32 %v45, %v232
  %v234 = vpop.f32.mrf.mxu0
  %235 = vmatprep.mubr.f32.mxu0 0.0
  %236 = vmatmul.mubr.f32.gmra.mxu0 %v94
  %v237 = vpop.f32.mrf.mxu0
  %v238 = vadd.f32 %v45, %v237
  %v239 = vpop.f32.mrf.mxu0
  %240 = vdwg.mxu0
  %v241 = vmax.f32 %v163, 0.0
  %v242 = vmax.f32 %v168, 0.0
  %v243 = vmax.f32 %v173, 0.0
  %v244 = vmax.f32 %v178, 0.0
  %v245 = vmax.f32 %v183, 0.0
  %v246 = vmax.f32 %v188, 0.0
  %v247 = vmax.f32 %v193, 0.0
  %v248 = vmax.f32 %v198, 0.0
  %v249 = vmax.f32 %v203, 0.0
  %v250 = vmax.f32 %v208, 0.0
  %v251 = vmax.f32 %v213, 0.0
  %v252 = vmax.f32 %v218, 0.0
  %v253 = vmax.f32 %v223, 0.0
  %v254 = vmax.f32 %v228, 0.0
  %v255 = vmax.f32 %v233, 0.0
  %v256 = vmax.f32 %v238, 0.0
  %v257 = vld [vmem:[%s3] sm:$0x3]
  %v258 = vld [vmem:[%s4] sm:$0x3]
  %260 = vset.pattern.permute.xlu0 0
  %261 = vperm.xlu0 %260, %v258
  %v262 = vpop.permute.xlu0 %261
  %264 = vmatprep.subr.mxu0 0.0
  %265 = vmatpush1.xpose.msra.mxu0 %v256
  %266 = vmatprep.subr.mxu0 0.0
  %267 = vmatpush1.xpose.msra.mxu0 %v255
  %268 = vmatprep.subr.mxu0 0.0
  %269 = vmatpush1.xpose.msra.mxu0 %v254
  %270 = vmatprep.subr.mxu0 0.0
  %271 = vmatpush1.xpose.msra.mxu0 %v253
  %272 = vmatprep.subr.mxu0 0.0
  %273 = vmatpush1.xpose.msra.mxu0 %v252
  %274 = vmatprep.subr.mxu0 0.0
  %275 = vmatpush1.xpose.msra.mxu0 %v251
  %276 = vmatprep.subr.mxu0 0.0
  %277 = vmatpush1.xpose.msra.mxu0 %v250
  %278 = vmatprep.subr.mxu0 0.0
  %279 = vmatpush1.xpose.msra.mxu0 %v249
  %280 = vmatprep.subr.mxu0 0.0
  %281 = vmatpush1.xpose.msra.mxu0 %v248
  %282 = vmatprep.subr.mxu0 0.0
  %283 = vmatpush1.xpose.msra.mxu0 %v247
  %284 = vmatprep.subr.mxu0 0.0
  %285 = vmatpush1.xpose.msra.mxu0 %v246
  %286 = vmatprep.subr.mxu0 0.0
  %287 = vmatpush1.xpose.msra.mxu0 %v245
  %288 = vmatprep.subr.mxu0 0.0
  %289 = vmatpush1.xpose.msra.mxu0 %v244
  %290 = vmatprep.subr.mxu0 0.0
  %291 = vmatpush1.xpose.msra.mxu0 %v243
  %292 = vmatprep.subr.mxu0 0.0
  %293 = vmatpush1.xpose.msra.mxu0 %v242
  %294 = vmatprep.subr.mxu0 0.0
  %295 = vmatpush1.xpose.msra.mxu0 %v241
  %296 = vmatprep.subr.mxu0 0.0
  %297 = vmatpush2.xpose.msra.mxu0 0.0
  %298 = vmatprep.subr.mxu0 0.0
  %299 = vmatpush2.xpose.msra.mxu0 0.0
  %300 = vmatprep.subr.mxu0 0.0
  %301 = vmatpush2.xpose.msra.mxu0 0.0
  %302 = vmatprep.subr.mxu0 0.0
  %303 = vmatpush2.xpose.msra.mxu0 0.0
  %304 = vmatprep.subr.mxu0 0.0
  %305 = vmatpush2.xpose.msra.mxu0 0.0
  %306 = vmatprep.subr.mxu0 0.0
  %307 = vmatpush2.xpose.msra.mxu0 0.0
  %308 = vmatprep.subr.mxu0 0.0
  %309 = vmatpush2.xpose.msra.mxu0 0.0
  %310 = vmatprep.subr.mxu0 0.0
  %311 = vmatpush2.xpose.msra.mxu0 0.0
  %312 = vmatprep.subr.mxu0 0.0
  %313 = vmatpush2.xpose.msra.mxu0 0.0
  %314 = vmatprep.subr.mxu0 0.0
  %315 = vmatpush2.xpose.msra.mxu0 0.0
  %316 = vmatprep.subr.mxu0 0.0
  %317 = vmatpush2.xpose.msra.mxu0 0.0
  %318 = vmatprep.subr.mxu0 0.0
  %319 = vmatpush2.xpose.msra.mxu0 0.0
  %320 = vmatprep.subr.mxu0 0.0
  %321 = vmatpush2.xpose.msra.mxu0 0.0
  %322 = vmatprep.subr.mxu0 0.0
  %323 = vmatpush2.xpose.msra.mxu0 0.0
  %324 = vmatprep.subr.mxu0 0.0
  %325 = vmatpush2.xpose.msra.mxu0 0.0
  %326 = vmatprep.subr.mxu0 0.0
  %327 = vmatpush2.xpose.msra.mxu0 0.0
  %328 = vmatprep.mubr.f32.mxu0 0.0
  %329 = vmatmul.mubr.f32.gmra.mxu0 %v257
  %v330 = vpop.f32.mrf.mxu0
  %v331 = vadd.f32 %v262, %v330
  %v332 = vpop.f32.mrf.mxu0
  %333 = vdwg.mxu0
  %v334 = vmax.f32 %v331, 0.0
  %v335 = vand.u32 2147483647, %v331
  %v336 = vsub.f32 0.0, %v335
  %v337 = vmul.f32 %v336, 1.442695
  %v338 = vpow.pop %v337
  %v339 = vadd.f32 %v338, 1.0
  %v340 = vlog2.pop %v339
  %v341 = vmul.f32 %v340, 0.6931472
  %v342 = vmul.f32 -0.5, %v338
  %v343 = vadd.f32 %v342, 1.0
  %v344 = vmul.f32 %v343, %v338
  %v345 = vand.u32 2147483647, %v338
  %vm346 = vcmp.lt.f32.partialorder %v345, 0.0004427343
  %v347 = vsel %vm346, %v344, %v341
  %v348 = vadd.f32 %v334, %v347
  %v349 = vlaneseq
  %v350 = vshrl.u32 %v349, 7
  %vm351 = vcmp.eq.s32.totalorder %v350, 1
  %v352 = vadd.f32 %v348, 1e-06
  %v353 = vsel %vm351, %v352, %v331
  %354 = vst [vmem:[%s5] sm:$0x3] %v353
  // Predicated region
  $region22: #{normal_model_forward.1} parent=0 // pred_check
    _
  $region23: #{normal_model_forward.1} parent=0 // pred_check_branch
    %356 = sbr.rel (0) target = $region25
  $region24: #{normal_model_forward.1} parent=0 // pred_region
    _
  $region25: #{normal_model_forward.1} parent=0 // pred_fallthru
    _
  // Predicated region
  $region26: #{normal_model_forward.1} parent=0 // pred_check
    _
  $region27: #{normal_model_forward.1} parent=0 // pred_check_branch
    %358 = sbr.rel (0) target = $region29
  $region28: #{normal_model_forward.1} parent=0 // pred_region
    _
  $region29: #{normal_model_forward.1} parent=0 // pred_fallthru
    _

</llo_original>
